<compile_context>
chip_gen: v7x
topology: tpu7x:2x2x1
jax: 0.10.0
libtpu: 0.0.40
codegen_flags: <defaults>
</compile_context>

<pallas_src>
import jax
import jax.numpy as jnp
from jax import lax
from jax.experimental import pallas as pl
from jax.experimental.pallas import tpu as pltpu

IN_F = 10
HID = 32
OUT_F = 2
BN_EPS = 1e-5

# Rows (lanes) per grid step. Lane-dense tiles are tiny (f32 x tile at TB=8192 is
# ~512 KiB), so this is far under every generation's VMEM limit even double-buffered.
DEFAULT_TB = 8192


def _privacy_classifier_kernel(xT_ref, w1T_ref, b1_ref, w2T_ref, b2_ref, outT_ref):
    # xT_ref: (IN_F, TB) — lane-dense along the batch. Cast up explicitly so the
    # bf16-read path still accumulates in f32.
    xT = xT_ref[...].astype(jnp.float32)

    # Linear(10, 32) with eval-mode BatchNorm folded into w1/b1, computed
    # feature-major: hT = W1f^T @ xT -> (HID, TB).
    hT = jnp.dot(w1T_ref[...], xT, preferred_element_type=jnp.float32) + b1_ref[...]

    # Dropout(0.1): identity in eval mode.
    # TODO(synk): training-mode dropout (PyTorch RNG-dependent) not reproduced.

    # ReLU
    hT = jnp.maximum(hT, 0.0)

    # Linear(32, 2): outT = W2^T @ hT -> (OUT_F, TB); lane-dense unmasked store.
    outT_ref[...] = (
        jnp.dot(w2T_ref[...], hT, preferred_element_type=jnp.float32) + b2_ref[...]
    ).astype(outT_ref.dtype)


def privacy_classifier_forward(x, params, *, tile_b=DEFAULT_TB, x_dtype=None):
    """x: (B, 10) float32. params: dict of arrays. Returns (B, 2) float32.

    x_dtype: optional narrower dtype (e.g. jnp.bfloat16) for the HBM x read stream.
    """
    B = x.shape[0]
    if B == 0:
        return jnp.zeros((0, OUT_F), jnp.float32)

    # ---- fold eval-mode BatchNorm into Linear1 (affine fold) -----------------
    inv_std = lax.rsqrt(params["running_var"] + BN_EPS)               # (HID,)
    scale = params["gamma"] * inv_std                                 # (HID,)
    w1T = (params["w1"] * scale[None, :]).T                           # (HID, IN_F)
    b1 = ((params["b1"] - params["running_mean"]) * scale + params["beta"]).reshape(HID, 1)
    w2T = params["w2"].T                                              # (OUT_F, HID)
    b2 = params["b2"].reshape(OUT_F, 1)

    # ---- feature-major / lane-dense x -----------------------------------------
    # TODO(synk): ideally the producer supplies x already as (IN_F, B); the
    # wrapper-side transpose still recovers the in-kernel lane-density win.
    xT = x.T                                                          # (IN_F, B)
    if x_dtype is not None:
        xT = xT.astype(x_dtype)

    # ---- batch tiling: lane dim of every block -> multiple of 128 --------------
    tb = max(128, min(int(tile_b), ((B + 127) // 128) * 128))
    tb = (tb // 128) * 128
    B_pad = ((B + tb - 1) // tb) * tb
    if B_pad != B:
        xT = jnp.pad(xT, ((0, 0), (0, B_pad - B)))
    grid = (B_pad // tb,)

    const = lambda shape: pl.BlockSpec(shape, lambda i: (0, 0))

    x_bytes = jnp.dtype(xT.dtype).itemsize
    cost = pl.CostEstimate(
        flops=2 * B_pad * (IN_F * HID + HID * OUT_F),
        transcendentals=0,
        bytes_accessed=B_pad * (IN_F * x_bytes + OUT_F * 4)
        + 4 * (HID * IN_F + HID + OUT_F * HID + OUT_F),
    )

    outT = pl.pallas_call(
        _privacy_classifier_kernel,
        out_shape=jax.ShapeDtypeStruct((OUT_F, B_pad), jnp.float32),
        grid=grid,
        in_specs=[
            pl.BlockSpec((IN_F, tb), lambda i: (0, i)),   # x: batch-tiled, lane-dense
            const((HID, IN_F)),                           # folded W1^T (resident)
            const((HID, 1)),                              # folded b1 (resident)
            const((OUT_F, HID)),                          # W2^T (resident)
            const((OUT_F, 1)),                            # b2 (resident)
        ],
        out_specs=pl.BlockSpec((OUT_F, tb), lambda i: (0, i)),
        compiler_params=pltpu.CompilerParams(
            # TODO(synk): on v7x, swap to pltpu.CORE_PARALLEL if profiling shows the
            # batch grid is not being sharded across the two TensorCores.
            dimension_semantics=("parallel",),
            vmem_limit_bytes=32 * 1024 * 1024,
        ),
        cost_estimate=cost,
    )(xT, w1T, b1, w2T, b2)

    # Back to the PyTorch-facing (B, 2) layout; drop padded rows.
    return outT[:, :B].T


def init_params(key):
    """Deterministic init matching the PyTorch module's parameter shapes."""
    k1, k2, k3, k4 = jax.random.split(key, 4)
    # PyTorch nn.Linear default: U(-1/sqrt(fan_in), 1/sqrt(fan_in))
    lim1 = 1.0 / jnp.sqrt(jnp.float32(IN_F))
    lim2 = 1.0 / jnp.sqrt(jnp.float32(HID))
    return {
        "w1": jax.random.uniform(k1, (IN_F, HID), jnp.float32, -lim1, lim1),
        "b1": jax.random.uniform(k2, (HID,), jnp.float32, -lim1, lim1),
        "gamma": jnp.ones((HID,), jnp.float32),
        "beta": jnp.zeros((HID,), jnp.float32),
        "running_mean": jnp.zeros((HID,), jnp.float32),
        "running_var": jnp.ones((HID,), jnp.float32),
        "w2": jax.random.uniform(k3, (HID, OUT_F), jnp.float32, -lim2, lim2),
        "b2": jax.random.uniform(k4, (OUT_F,), jnp.float32, -lim2, lim2),
    }


def reference_forward(x, params):
    """Pure-JAX reference (eval-mode semantics, un-folded BN) for correctness check."""
    h = x @ params["w1"] + params["b1"]
    h = (h - params["running_mean"]) / jnp.sqrt(params["running_var"] + BN_EPS)
    h = h * params["gamma"] + params["beta"]
    h = jnp.maximum(h, 0.0)
    return h @ params["w2"] + params["b2"]


if __name__ == "__main__":
    key = jax.random.PRNGKey(0)
    kx, kp = jax.random.split(key)
    params = init_params(kp)

    # Small batch (single tile, padded to 128 lanes internally).
    B = 8
    x = jax.random.normal(kx, (B, IN_F), jnp.float32)
    out = jax.block_until_ready(privacy_classifier_forward(x, params))
    ref = reference_forward(x, params)
    assert out.shape == (B, OUT_F)
    assert jnp.allclose(out, ref, atol=1e-5, rtol=1e-4), "mismatch vs reference"

    # Ragged, multi-tile batch (tile_b=128 forces grid > 1).
    B2 = 300
    x2 = jax.random.normal(kx, (B2, IN_F), jnp.float32)
    out2 = jax.block_until_ready(privacy_classifier_forward(x2, params, tile_b=128))
    ref2 = reference_forward(x2, params)
    assert out2.shape == (B2, OUT_F)
    assert jnp.allclose(out2, ref2, atol=1e-5, rtol=1e-4), "mismatch vs reference (tiled)"

    # bf16 x read stream (halves HBM read traffic); f32 accumulation inside.
    out3 = jax.block_until_ready(
        privacy_classifier_forward(x2, params, tile_b=128, x_dtype=jnp.bfloat16))
    ref3 = reference_forward(x2.astype(jnp.bfloat16).astype(jnp.float32), params)
    assert out3.shape == (B2, OUT_F)
    assert jnp.allclose(out3, ref3, atol=1e-3, rtol=1e-3), "mismatch vs reference (bf16 x)"

    print("KERNEL_OK")
</pallas_src>

<mosaic_0001>
module attributes {stable_mosaic.version = 11 : i64} {
  func.func @_privacy_classifier_kernel(%arg0: i32, %arg1: memref<10x128xf32, #tpu.memory_space<vmem>>, %arg2: memref<32x10xf32, #tpu.memory_space<vmem>>, %arg3: memref<32x1xf32, #tpu.memory_space<vmem>>, %arg4: memref<2x32xf32, #tpu.memory_space<vmem>>, %arg5: memref<2x1xf32, #tpu.memory_space<vmem>>, %arg6: memref<2x128xf32, #tpu.memory_space<vmem>>) attributes {dimension_semantics = [#tpu.dimension_semantics<parallel>], iteration_bounds = array<i64: 1>, scalar_prefetch = 0 : i64, scratch_operands = 0 : i64, tpu.core_type = #tpu.core_type<tc>, window_params = [{transform_indices = @transform_0, window_bounds = array<i64: 10, 128>}, {pipeline_mode = #tpu.pipeline_mode<synchronous>, transform_indices = @transform_1, window_bounds = array<i64: 32, 10>}, {pipeline_mode = #tpu.pipeline_mode<synchronous>, transform_indices = @transform_2, window_bounds = array<i64: 32, 1>}, {pipeline_mode = #tpu.pipeline_mode<synchronous>, transform_indices = @transform_3, window_bounds = array<i64: 2, 32>}, {pipeline_mode = #tpu.pipeline_mode<synchronous>, transform_indices = @transform_4, window_bounds = array<i64: 2, 1>}, {transform_indices = @transform_5, window_bounds = array<i64: 2, 128>}]} {
    %c0 = arith.constant 0 : index
    %c0_0 = arith.constant 0 : index
    %0 = vector.load %arg1[%c0, %c0_0] : memref<10x128xf32, #tpu.memory_space<vmem>>, vector<10x128xf32>
    %c0_1 = arith.constant 0 : index
    %c0_2 = arith.constant 0 : index
    %1 = vector.load %arg2[%c0_1, %c0_2] : memref<32x10xf32, #tpu.memory_space<vmem>>, vector<32x10xf32>
    %cst = arith.constant dense<0.000000e+00> : vector<32x128xf32>
    %2 = tpu.matmul %1, %0, %cst {dimension_numbers = #tpu.dot_dimension_numbers<[1], [0], [0], [1], [0, 0, 1, 1], [], []>} : vector<32x10xf32>, vector<10x128xf32>, vector<32x128xf32> -> vector<32x128xf32>
    %c0_3 = arith.constant 0 : index
    %c0_4 = arith.constant 0 : index
    %3 = vector.load %arg3[%c0_3, %c0_4] : memref<32x1xf32, #tpu.memory_space<vmem>>, vector<32x1xf32>
    %4 = vector.broadcast %3 : vector<32x1xf32> to vector<32x128xf32>
    %5 = arith.addf %2, %4 : vector<32x128xf32>
    %cst_5 = arith.constant 0.000000e+00 : f32
    %6 = vector.broadcast %cst_5 : f32 to vector<32x128xf32>
    %7 = arith.maximumf %5, %6 : vector<32x128xf32>
    %c0_6 = arith.constant 0 : index
    %c0_7 = arith.constant 0 : index
    %8 = vector.load %arg4[%c0_6, %c0_7] : memref<2x32xf32, #tpu.memory_space<vmem>>, vector<2x32xf32>
    %cst_8 = arith.constant dense<0.000000e+00> : vector<2x128xf32>
    %9 = tpu.matmul %8, %7, %cst_8 {dimension_numbers = #tpu.dot_dimension_numbers<[1], [0], [0], [1], [0, 0, 1, 1], [], []>} : vector<2x32xf32>, vector<32x128xf32>, vector<2x128xf32> -> vector<2x128xf32>
    %c0_9 = arith.constant 0 : index
    %c0_10 = arith.constant 0 : index
    %10 = vector.load %arg5[%c0_9, %c0_10] : memref<2x1xf32, #tpu.memory_space<vmem>>, vector<2x1xf32>
    %11 = vector.broadcast %10 : vector<2x1xf32> to vector<2x128xf32>
    %12 = arith.addf %9, %11 : vector<2x128xf32>
    %c0_11 = arith.constant 0 : index
    %c0_12 = arith.constant 0 : index
    %13 = vector.load %arg6[%c0_11, %c0_12] : memref<2x128xf32, #tpu.memory_space<vmem>>, vector<2x128xf32>
    tpu.vector_store %arg6[%c0_11, %c0_12], %12 {strides = array<i32>} : memref<2x128xf32, #tpu.memory_space<vmem>>, vector<2x128xf32>,
    return
  }
  func.func @transform_0(%arg0: i32) -> (i32, i32) {
    %c0_i32 = arith.constant 0 : i32
    %c0_i32_0 = arith.constant 0 : i32
    return %c0_i32, %arg0 : i32, i32
  }
  func.func @transform_1(%arg0: i32) -> (i32, i32) {
    %c0_i32 = arith.constant 0 : i32
    %c0_i32_0 = arith.constant 0 : i32
    %c0_i32_1 = arith.constant 0 : i32
    return %c0_i32, %c0_i32_0 : i32, i32
  }
  func.func @transform_2(%arg0: i32) -> (i32, i32) {
    %c0_i32 = arith.constant 0 : i32
    %c0_i32_0 = arith.constant 0 : i32
    %c0_i32_1 = arith.constant 0 : i32
    return %c0_i32, %c0_i32_0 : i32, i32
  }
  func.func @transform_3(%arg0: i32) -> (i32, i32) {
    %c0_i32 = arith.constant 0 : i32
    %c0_i32_0 = arith.constant 0 : i32
    %c0_i32_1 = arith.constant 0 : i32
    return %c0_i32, %c0_i32_0 : i32, i32
  }
  func.func @transform_4(%arg0: i32) -> (i32, i32) {
    %c0_i32 = arith.constant 0 : i32
    %c0_i32_0 = arith.constant 0 : i32
    %c0_i32_1 = arith.constant 0 : i32
    return %c0_i32, %c0_i32_0 : i32, i32
  }
  func.func @transform_5(%arg0: i32) -> (i32, i32) {
    %c0_i32 = arith.constant 0 : i32
    %c0_i32_0 = arith.constant 0 : i32
    return %c0_i32, %arg0 : i32, i32
  }
}

</mosaic_0001>

<llo_original>
// kernel: tpu_custom_call.1
$region0: #{tpu_custom_call.1}
  #allocation0 [shape = 'u32[]', space=smem, size = 0x4, offset = 0x4, fixed_abs, tag = 'smem constant byte address 0x4 - core index']
  #allocation1 [shape = 'u32[144,128]{1,0:T(1,128)}', space=vmem, size = 0x12000, scoped, tag = 'internal scratch']
  %s0 = inlined_call_operand.vmem [shape: f32[10,128], index: 0, kind: input, shape index: {}]
  %s1 = inlined_call_operand.vmem [shape: f32[32,10], index: 1, kind: input, shape index: {}]
  %s2 = inlined_call_operand.vmem [shape: f32[32,1], index: 2, kind: input, shape index: {}]
  %s3 = inlined_call_operand.vmem [shape: f32[2,32], index: 3, kind: input, shape index: {}]
  %s4 = inlined_call_operand.vmem [shape: f32[2,1], index: 4, kind: input, shape index: {}]
  %s5 = inlined_call_operand.hbm [shape: f32[2,128], index: 5, kind: output, shape index: {}]
  %s6 = sld [smem:[#allocation0]]
  $region30: #{tpu_custom_call.1} parent=0
    _
  %s8 = ssub.s32 1, %s6
  %s9 = scalar_select 0, %s8, %s6
  $region1: #{tpu_custom_call.1} parent=0
    #allocation2 [shape = 'u8[1024]{0}', space=vmem, size = 0x400, scoped, tag = 'output window, operand 0, single buffered']
    #allocation3 [shape = 's32[1]{0}', space=sflag, size = 0x4, scoped, tag = 'scoped memory for tpu_custom_call.1']
    %10 = vsyncpa [#allocation3], 0
    // Predicated region
    $region2: #{tpu_custom_call.1} parent=1 // pred_check
      _
    $region3: #{tpu_custom_call.1} parent=1 // pred_check_branch
      %12 = sbr.rel (0) target = $region5
    $region4: #{tpu_custom_call.1} parent=1 // pred_region
      _
    $region5: #{tpu_custom_call.1} parent=1 // pred_fallthru
      _
    // Predicated region
    $region6: #{tpu_custom_call.1} parent=1 // pred_check
      _
    $region7: #{tpu_custom_call.1} parent=1 // pred_check_branch
      %14 = sbr.rel (0) target = $region9
    $region8: #{tpu_custom_call.1} parent=1 // pred_region
      _
    $region9: #{tpu_custom_call.1} parent=1 // pred_fallthru
      _
    // Predicated region
    $region10: #{tpu_custom_call.1} parent=1 // pred_check
      _
    $region11: #{tpu_custom_call.1} parent=1 // pred_check_branch
      %16 = sbr.rel (0) target = $region13
    $region12: #{tpu_custom_call.1} parent=1 // pred_region
      _
    $region13: #{tpu_custom_call.1} parent=1 // pred_fallthru
      _
    // Predicated region
    $region14: #{tpu_custom_call.1} parent=1 // pred_check
      _
    $region15: #{tpu_custom_call.1} parent=1 // pred_check_branch
      %18 = sbr.rel (0) target = $region17
    $region16: #{tpu_custom_call.1} parent=1 // pred_region
      _
    $region17: #{tpu_custom_call.1} parent=1 // pred_fallthru
      _
    // Predicated region
    $region18: #{tpu_custom_call.1} parent=1 // pred_check
      _
    $region19: #{tpu_custom_call.1} parent=1 // pred_check_branch
      %20 = sbr.rel (0) target = $region21
    $region20: #{tpu_custom_call.1} parent=1 // pred_region
      _
    $region21: #{tpu_custom_call.1} parent=1 // pred_fallthru
      _
    %v21 = vld [vmem:[%s0] sm:$0xff]
    %v22 = vld [vmem:[%s0 + $0x8] sm:$0x3]
    %v23 = vld [vmem:[%s1] sm:$0xff]
    %v24 = vld [vmem:[%s1 + $0x8] sm:$0xff]
    %v25 = vld [vmem:[%s1 + $0x10] sm:$0xff]
    %v26 = vld [vmem:[%s1 + $0x18] sm:$0xff]
    %v27 = vld [vmem:[%s2] sm:$0xff]
    %v28 = vld [vmem:[%s2 + $0x8] sm:$0xff]
    %v29 = vld [vmem:[%s2 + $0x10] sm:$0xff]
    %v30 = vld [vmem:[%s2 + $0x18] sm:$0xff]
    %32 = vset.pattern.permute.xlu0 0
    %33 = vperm.xlu0 %32, %v27
    %v34 = vpop.permute.xlu0 %33
    %37 = vset.pattern.permute.xlu0 0
    %38 = vperm.xlu0 %37, %v28
    %v39 = vpop.permute.xlu0 %38
    %42 = vset.pattern.permute.xlu0 0
    %43 = vperm.xlu0 %42, %v29
    %v44 = vpop.permute.xlu0 %43
    %47 = vset.pattern.permute.xlu0 0
    %48 = vperm.xlu0 %47, %v30
    %v49 = vpop.permute.xlu0 %48
    %vm51 = vcmask 80896
    %v53 = vsel %vm51, %v23, 0
    %v56 = vsel %vm51, %v24, 0
    %v59 = vsel %vm51, %v25, 0
    %v62 = vsel %vm51, %v26, 0
    %vm64 = vcmask 1041408
    %v66 = vsel %vm64, %v22, 0
    %68 = vmatprep.subr.mxu0 0.0
    %69 = vmatpush1.msra.mxu0 %v21
    %70 = vmatprep.subr.mxu0 0.0
    %71 = vmatpush1.msra.mxu0 %v66
    %72 = vmatprep.subr.mxu0 0.0
    %73 = vmatpush1.msra.mxu0 0.0
    %74 = vmatprep.subr.mxu0 0.0
    %75 = vmatpush1.msra.mxu0 0.0
    %76 = vmatprep.subr.mxu0 0.0
    %77 = vmatpush1.msra.mxu0 0.0
    %78 = vmatprep.subr.mxu0 0.0
    %79 = vmatpush1.msra.mxu0 0.0
    %80 = vmatprep.subr.mxu0 0.0
    %81 = vmatpush1.msra.mxu0 0.0
    %82 = vmatprep.subr.mxu0 0.0
    %83 = vmatpush1.msra.mxu0 0.0
    %84 = vmatprep.subr.mxu0 0.0
    %85 = vmatpush1.msra.mxu0 0.0
    %86 = vmatprep.subr.mxu0 0.0
    %87 = vmatpush1.msra.mxu0 0.0
    %88 = vmatprep.subr.mxu0 0.0
    %89 = vmatpush1.msra.mxu0 0.0
    %90 = vmatprep.subr.mxu0 0.0
    %91 = vmatpush1.msra.mxu0 0.0
    %92 = vmatprep.subr.mxu0 0.0
    %93 = vmatpush1.msra.mxu0 0.0
    %94 = vmatprep.subr.mxu0 0.0
    %95 = vmatpush1.msra.mxu0 0.0
    %96 = vmatprep.subr.mxu0 0.0
    %97 = vmatpush1.msra.mxu0 0.0
    %98 = vmatprep.subr.mxu0 0.0
    %99 = vmatpush1.msra.mxu0 0.0
    %100 = vmatprep.subr.mxu0 0.0
    %101 = vmatpush1.msra.mxu0 0.0
    %102 = vmatprep.subr.mxu0 0.0
    %103 = vmatpush1.msra.mxu0 0.0
    %104 = vmatprep.subr.mxu0 0.0
    %105 = vmatpush1.msra.mxu0 0.0
    %106 = vmatprep.subr.mxu0 0.0
    %107 = vmatpush1.msra.mxu0 0.0
    %108 = vmatprep.subr.mxu0 0.0
    %109 = vmatpush1.msra.mxu0 0.0
    %110 = vmatprep.subr.mxu0 0.0
    %111 = vmatpush1.msra.mxu0 0.0
    %112 = vmatprep.subr.mxu0 0.0
    %113 = vmatpush1.msra.mxu0 0.0
    %114 = vmatprep.subr.mxu0 0.0
    %115 = vmatpush1.msra.mxu0 0.0
    %116 = vmatprep.subr.mxu0 0.0
    %117 = vmatpush1.msra.mxu0 0.0
    %118 = vmatprep.subr.mxu0 0.0
    %119 = vmatpush1.msra.mxu0 0.0
    %120 = vmatprep.subr.mxu0 0.0
    %121 = vmatpush1.msra.mxu0 0.0
    %122 = vmatprep.subr.mxu0 0.0
    %123 = vmatpush1.msra.mxu0 0.0
    %124 = vmatprep.subr.mxu0 0.0
    %125 = vmatpush1.msra.mxu0 0.0
    %126 = vmatprep.subr.mxu0 0.0
    %127 = vmatpush1.msra.mxu0 0.0
    %128 = vmatprep.subr.mxu0 0.0
    %129 = vmatpush1.msra.mxu0 0.0
    %130 = vmatprep.subr.mxu0 0.0
    %131 = vmatpush1.msra.mxu0 0.0
    %132 = vmatprep.mubr.f32.mxu0 0.0
    %133 = vmatmul.mubr.f32.gmra.mrb[0].mxu0 %v53
    %v134 = vpop.f32.mrb[0].mxu0
    %v135 = vadd.f32 %v34, %v134
    %v136 = vpop.f32.mrb[0].mxu0
    %137 = vmatprep.mubr.f32.mxu0 0.0
    %138 = vmatmul.mubr.f32.gmra.mrb[0].mxu0 %v56
    %v139 = vpop.f32.mrb[0].mxu0
    %v140 = vadd.f32 %v39, %v139
    %v141 = vpop.f32.mrb[0].mxu0
    %142 = vmatprep.mubr.f32.mxu0 0.0
    %143 = vmatmul.mubr.f32.gmra.mrb[0].mxu0 %v59
    %v144 = vpop.f32.mrb[0].mxu0
    %v145 = vadd.f32 %v44, %v144
    %v146 = vpop.f32.mrb[0].mxu0
    %147 = vmatprep.mubr.f32.mxu0 0.0
    %148 = vmatmul.mubr.f32.gmra.mrb[0].mxu0 %v62
    %v149 = vpop.f32.mrb[0].mxu0
    %v150 = vadd.f32 %v49, %v149
    %v151 = vpop.f32.mrb[0].mxu0
    %152 = vdwg.mxu0
    %v153 = vmax.f32 %v135, 0.0
    %v154 = vmax.f32 %v140, 0.0
    %v155 = vmax.f32 %v145, 0.0
    %v156 = vmax.f32 %v150, 0.0
    %v157 = vld [vmem:[%s3] sm:$0x3]
    %v158 = vld [vmem:[%s4] sm:$0x3]
    %160 = vset.pattern.permute.xlu0 0
    %161 = vperm.xlu0 %160, %v158
    %v162 = vpop.permute.xlu0 %161
    %vm164 = vcmask 261120
    %v166 = vsel %vm164, %v157, 0
    %168 = vmatprep.subr.mxu0 0.0
    %169 = vmatpush1.msra.mxu0 %v153
    %170 = vmatprep.subr.mxu0 0.0
    %171 = vmatpush1.msra.mxu0 %v154
    %172 = vmatprep.subr.mxu0 0.0
    %173 = vmatpush1.msra.mxu0 %v155
    %174 = vmatprep.subr.mxu0 0.0
    %175 = vmatpush1.msra.mxu0 %v156
    %176 = vmatprep.subr.mxu0 0.0
    %177 = vmatpush1.msra.mxu0 0.0
    %178 = vmatprep.subr.mxu0 0.0
    %179 = vmatpush1.msra.mxu0 0.0
    %180 = vmatprep.subr.mxu0 0.0
    %181 = vmatpush1.msra.mxu0 0.0
    %182 = vmatprep.subr.mxu0 0.0
    %183 = vmatpush1.msra.mxu0 0.0
    %184 = vmatprep.subr.mxu0 0.0
    %185 = vmatpush1.msra.mxu0 0.0
    %186 = vmatprep.subr.mxu0 0.0
    %187 = vmatpush1.msra.mxu0 0.0
    %188 = vmatprep.subr.mxu0 0.0
    %189 = vmatpush1.msra.mxu0 0.0
    %190 = vmatprep.subr.mxu0 0.0
    %191 = vmatpush1.msra.mxu0 0.0
    %192 = vmatprep.subr.mxu0 0.0
    %193 = vmatpush1.msra.mxu0 0.0
    %194 = vmatprep.subr.mxu0 0.0
    %195 = vmatpush1.msra.mxu0 0.0
    %196 = vmatprep.subr.mxu0 0.0
    %197 = vmatpush1.msra.mxu0 0.0
    %198 = vmatprep.subr.mxu0 0.0
    %199 = vmatpush1.msra.mxu0 0.0
    %200 = vmatprep.subr.mxu0 0.0
    %201 = vmatpush1.msra.mxu0 0.0
    %202 = vmatprep.subr.mxu0 0.0
    %203 = vmatpush1.msra.mxu0 0.0
    %204 = vmatprep.subr.mxu0 0.0
    %205 = vmatpush1.msra.mxu0 0.0
    %206 = vmatprep.subr.mxu0 0.0
    %207 = vmatpush1.msra.mxu0 0.0
    %208 = vmatprep.subr.mxu0 0.0
    %209 = vmatpush1.msra.mxu0 0.0
    %210 = vmatprep.subr.mxu0 0.0
    %211 = vmatpush1.msra.mxu0 0.0
    %212 = vmatprep.subr.mxu0 0.0
    %213 = vmatpush1.msra.mxu0 0.0
    %214 = vmatprep.subr.mxu0 0.0
    %215 = vmatpush1.msra.mxu0 0.0
    %216 = vmatprep.subr.mxu0 0.0
    %217 = vmatpush1.msra.mxu0 0.0
    %218 = vmatprep.subr.mxu0 0.0
    %219 = vmatpush1.msra.mxu0 0.0
    %220 = vmatprep.subr.mxu0 0.0
    %221 = vmatpush1.msra.mxu0 0.0
    %222 = vmatprep.subr.mxu0 0.0
    %223 = vmatpush1.msra.mxu0 0.0
    %224 = vmatprep.subr.mxu0 0.0
    %225 = vmatpush1.msra.mxu0 0.0
    %226 = vmatprep.subr.mxu0 0.0
    %227 = vmatpush1.msra.mxu0 0.0
    %228 = vmatprep.subr.mxu0 0.0
    %229 = vmatpush1.msra.mxu0 0.0
    %230 = vmatprep.subr.mxu0 0.0
    %231 = vmatpush1.msra.mxu0 0.0
    %232 = vmatprep.mubr.f32.mxu0 0.0
    %233 = vmatmul.mubr.f32.gmra.mrb[0].mxu0 %v166
    %v234 = vpop.f32.mrb[0].mxu0
    %v235 = vadd.f32 %v162, %v234
    %v236 = vpop.f32.mrb[0].mxu0
    %237 = vdwg.mxu0
    %238 = vst [vmem:[#allocation2] sm:$0x3] %v235
    // Predicated region
    $region22: #{tpu_custom_call.1} parent=1 // pred_check
      _
    $region23: #{tpu_custom_call.1} parent=1 // pred_check_branch
      %240 = sbr.rel (0) target = $region25
    $region24: #{tpu_custom_call.1} parent=1 // pred_region
      %s242 = ssub.s32 32, 32
      %243 = vsyncadd [#allocation3], %s242
      %s245 = sshll.u32 [#allocation2], 4
      %s246 = int_to_ptr.vmem [resolvable:$true] %s245
      %248 = dma.vmem_to_hbm [thread:$0]  %s246, 32, %s5, [#allocation3]
    $region25: #{tpu_custom_call.1} parent=1 // pred_fallthru
      _
    // Predicated region
    $region26: #{tpu_custom_call.1} parent=1 // pred_check
      _
    $region27: #{tpu_custom_call.1} parent=1 // pred_check_branch
      %250 = sbr.rel (0) target = $region29
    $region28: #{tpu_custom_call.1} parent=1 // pred_region
      %251 = dma.done [#allocation3], 32
    $region29: #{tpu_custom_call.1} parent=1 // pred_fallthru
      _
    %252 = vsyncpa [#allocation3], 1

</llo_original>
